<compile_context>
chip_gen: v7x
topology: tpu7x:2x2x1
jax: 0.10.0
libtpu: 0.0.40
codegen_flags: <defaults>
</compile_context>

<pallas_src>
import jax
import jax.numpy as jnp
import numpy as np
from jax.experimental import pallas as pl
from jax.experimental.pallas import tpu as pltpu

# ---------------- configuration (signal_game=True path) ----------------
B = 8
N_OPTS = 4
N_DIMS = 8
FEATURE_DIM = N_OPTS + N_OPTS * N_DIMS          # 36
HID = 32                                        # pre_net / vf_net hidden width
BNECK = 16                                      # bottleneck width == latent_dim_vf
VECS = N_OPTS * N_DIMS                          # 32 (flattened option vectors)
PI_OUT = 32                                     # post_net width == latent_dim_pi
TEMP = 1.0
HARD = False

LANES = 128
IN1 = N_DIMS + VECS                             # 40  ([x | vecs_flat])
N1 = 2 * HID + PI_OUT                           # 96  ([pre-hid | vf-hid | pi-partial])
N2 = 2 * BNECK                                  # 32  ([logits | vf])
N3 = PI_OUT                                     # 32

# row offsets inside the packed parameter blob (sublane / 8-aligned)
_r8 = lambda n: (n + 7) // 8 * 8
R_W1 = 0
R_B1 = _r8(R_W1 + IN1)          # 40
R_W2 = _r8(R_B1 + 1)            # 48
R_B2 = R_W2 + 2 * HID           # 112
R_W3 = _r8(R_B2 + 1)            # 120
P_ROWS = _r8(R_W3 + BNECK)      # 136

# row offsets inside the packed activation slab
A_SCORES = 0                    # (B, n_opts)   scores
A_BASE = B                      # (B, IN1)      [zeros(n_dims) | vecs_flat]
A_GUMBEL = 2 * B                # (B, BNECK)    gumbel noise
A_VECS = 3 * B                  # option o at rows A_VECS + o*B  -> [vecs[:,o] | zeros]
A_ROWS = (3 + N_OPTS) * B       # 56


# ---------------- Pallas kernel ----------------
def bottleneck_kernel(act_ref, p_ref, out_ref):
    # ---- _restructure: argmax over score columns (first-occurrence tie break) ----
    scores = act_ref[A_SCORES:A_SCORES + B, 0:N_OPTS]                     # (B, n_opts)
    iota = jax.lax.broadcasted_iota(jnp.int32, (B, N_OPTS), 1)
    smax = jnp.max(scores, axis=-1, keepdims=True)
    idx = jnp.min(jnp.where(scores == smax, iota, N_OPTS), axis=-1, keepdims=True)

    # ---- gather: build [x | vecs_flat] directly, using only leading-axis slices ----
    in1 = act_ref[A_BASE:A_BASE + B, 0:IN1]                               # [0 | vecs_flat]
    for o in range(N_OPTS):
        v_o = act_ref[A_VECS + o * B:A_VECS + (o + 1) * B, 0:IN1]         # [vecs[:,o] | 0]
        in1 = in1 + jnp.where(idx == o, v_o, 0.0)

    # ---- fused matmul #1: pre_net L0, vf_net L0, and post_net's vecs contribution ----
    w1 = p_ref[R_W1:R_W1 + IN1, 0:N1]
    b1 = p_ref[R_B1:R_B1 + 1, 0:N1]
    out1 = jnp.dot(in1, w1, preferred_element_type=jnp.float32) + b1      # (B, 96)
    h12 = jnp.tanh(out1[:, 0:2 * HID])                                    # [h_pre | h_vf]
    pi_part = out1[:, 2 * HID:N1]                                         # vecs@Wq_b + bq0

    # ---- fused matmul #2: pre_net L1 and vf_net L1 (block-diagonal) ----
    w2 = p_ref[R_W2:R_W2 + 2 * HID, 0:N2]
    b2 = p_ref[R_B2:R_B2 + 1, 0:N2]
    out2 = jnp.dot(h12, w2, preferred_element_type=jnp.float32) + b2      # (B, 32)
    logits = out2[:, 0:BNECK]
    vf = out2[:, BNECK:N2]

    # ---- bottleneck: gumbel_softmax(logits, tau, hard, dim=-1) ----
    gumbel = act_ref[A_GUMBEL:A_GUMBEL + B, 0:BNECK]
    z = (logits + gumbel) * (1.0 / TEMP)
    z = z - jnp.max(z, axis=-1, keepdims=True)
    p = jnp.exp(z)
    s = jnp.sum(p, axis=-1, keepdims=True)
    r = pl.reciprocal(s, approx=True)          # EUP slot (otherwise idle)
    r = r * (2.0 - s * r)                      # one Newton step -> ~full f32 accuracy
    y = p * r
    if HARD:
        # TODO(synk): straight-through estimator needed if gradients of hard mode matter.
        ii = jax.lax.broadcasted_iota(jnp.int32, y.shape, 1)
        ymax = jnp.max(y, axis=-1, keepdims=True)
        yi = jnp.min(jnp.where(y == ymax, ii, y.shape[1]), axis=-1, keepdims=True)
        y = (ii == yi).astype(jnp.float32)

    # ---- matmul #3: post_net Linear on the bottleneck part, then tanh ----
    w3 = p_ref[R_W3:R_W3 + BNECK, 0:N3]
    pi = jnp.tanh(jnp.dot(y, w3, preferred_element_type=jnp.float32) + pi_part)

    # ---- merged output: [pi | vf] in one buffer (single writeback DMA) ----
    out_ref[:, 0:PI_OUT] = pi
    out_ref[:, PI_OUT:PI_OUT + BNECK] = vf


# ---------------- parameter packing (host side, once at init) ----------------
def pack_params(params):
    """Fuse the 10 Linear tensors into one tile-padded parameter blob."""
    wp0, bp0, wp1, bp1, wv0, bv0, wv1, bv1, wq0, bq0 = (np.asarray(t) for t in params)
    wq_a, wq_b = wq0[:BNECK], wq0[BNECK:]
    blob = np.zeros((P_ROWS, LANES), np.float32)
    # W1 = [[Wp0 Wv0 0], [0 0 Wq_b]]   (IN1, N1)
    blob[R_W1:R_W1 + N_DIMS, 0:HID] = wp0
    blob[R_W1:R_W1 + N_DIMS, HID:2 * HID] = wv0
    blob[R_W1 + N_DIMS:R_W1 + IN1, 2 * HID:N1] = wq_b
    blob[R_B1, 0:N1] = np.concatenate([bp0[0], bv0[0], bq0[0]])
    # W2 = blockdiag(Wp1, Wv1)         (2*HID, N2)
    blob[R_W2:R_W2 + HID, 0:BNECK] = wp1
    blob[R_W2 + HID:R_W2 + 2 * HID, BNECK:N2] = wv1
    blob[R_B2, 0:N2] = np.concatenate([bp1[0], bv1[0]])
    # W3 = Wq_a (bq0 already folded into b1's pi-partial block)
    blob[R_W3:R_W3 + BNECK, 0:N3] = wq_a
    return jnp.asarray(blob)


# ---------------- activation packing (light XLA glue, per call) ----------------
def pack_acts(feats, gumbel):
    scores = feats[:, :N_OPTS]
    vecs_flat = feats[:, N_OPTS:]
    pad = lambda a: jnp.pad(a, ((0, 0), (0, LANES - a.shape[1])))
    base = jnp.pad(vecs_flat, ((0, 0), (N_DIMS, LANES - N_DIMS - VECS)))   # [0 | vecs_flat]
    vecs_t = (vecs_flat.reshape(B, N_OPTS, N_DIMS)
              .transpose(1, 0, 2).reshape(N_OPTS * B, N_DIMS))
    return jnp.concatenate([pad(scores), base, pad(gumbel), pad(vecs_t)], axis=0)


# ---------------- wrapper ----------------
@jax.jit
def bottleneck_extractor(feats, gumbel, param_blob):
    act = pack_acts(feats, gumbel)                      # (56, 128) single input DMA
    vmem = pl.BlockSpec(memory_space=pltpu.MemorySpace.VMEM)
    out = pl.pallas_call(
        bottleneck_kernel,
        out_shape=jax.ShapeDtypeStruct((B, PI_OUT + BNECK), jnp.float32),
        in_specs=[vmem, vmem],
        out_specs=vmem,
    )(act, param_blob)
    return out[:, :PI_OUT], out[:, PI_OUT:]


# ---------------- pure-JAX reference (for correctness check) ----------------
def reference(feats, gumbel, params):
    (wp0, bp0, wp1, bp1, wv0, bv0, wv1, bv1, wq0, bq0) = params
    idx = jnp.argmax(feats[:, :N_OPTS], axis=-1)
    vecs = feats[:, N_OPTS:].reshape(B, N_OPTS, N_DIMS)
    x = vecs[jnp.arange(B), idx]
    h = jnp.tanh(x @ wp0 + bp0)
    logits = h @ wp1 + bp1
    y = jax.nn.softmax((logits + gumbel) / TEMP, axis=-1)
    if HARD:
        y = jax.nn.one_hot(jnp.argmax(y, axis=-1), BNECK, dtype=jnp.float32)
    post_in = jnp.concatenate([y, feats[:, N_OPTS:]], axis=-1)
    pi = jnp.tanh(post_in @ wq0 + bq0)
    hv = jnp.tanh(x @ wv0 + bv0)
    vf = hv @ wv1 + bv1
    return pi, vf


def init_params(key):
    def lin(k, fan_in, fan_out):
        kw, kb = jax.random.split(k)
        bound = 1.0 / np.sqrt(fan_in)
        w = jax.random.uniform(kw, (fan_in, fan_out), jnp.float32, -bound, bound)
        b = jax.random.uniform(kb, (1, fan_out), jnp.float32, -bound, bound)
        return w, b

    keys = jax.random.split(key, 5)
    wp0, bp0 = lin(keys[0], N_DIMS, HID)
    wp1, bp1 = lin(keys[1], HID, BNECK)
    wv0, bv0 = lin(keys[2], N_DIMS, HID)
    wv1, bv1 = lin(keys[3], HID, BNECK)
    wq0, bq0 = lin(keys[4], BNECK + VECS, PI_OUT)
    return (wp0, bp0, wp1, bp1, wv0, bv0, wv1, bv1, wq0, bq0)


if __name__ == "__main__":
    key = jax.random.PRNGKey(0)
    k_feat, k_gumbel, k_params = jax.random.split(key, 3)

    feats = jax.random.normal(k_feat, (B, FEATURE_DIM), jnp.float32)
    # gumbel noise sampled deterministically in the wrapper (glue), consumed in-kernel
    gumbel = jax.random.gumbel(k_gumbel, (B, BNECK), jnp.float32)
    params = init_params(k_params)
    param_blob = pack_params(params)            # fused / packed ONCE at init

    pi, vf = jax.block_until_ready(bottleneck_extractor(feats, gumbel, param_blob))
    pi_ref, vf_ref = reference(feats, gumbel, params)

    # vf path is exact matmul math; pi path includes the EUP approx-reciprocal (+Newton).
    np.testing.assert_allclose(np.asarray(vf), np.asarray(vf_ref), rtol=1e-4, atol=1e-5)
    np.testing.assert_allclose(np.asarray(pi), np.asarray(pi_ref), rtol=1e-3, atol=1e-4)
    assert pi.shape == (B, PI_OUT) and vf.shape == (B, BNECK)

    print("KERNEL_OK")
</pallas_src>

<mosaic_0001>
module attributes {stable_mosaic.version = 11 : i64} {
  func.func @bottleneck_kernel(%arg0: memref<56x128xf32, #tpu.memory_space<vmem>>, %arg1: memref<136x128xf32, #tpu.memory_space<vmem>>, %arg2: memref<8x48xf32, #tpu.memory_space<vmem>>) attributes {dimension_semantics = [], scalar_prefetch = 0 : i64, scratch_operands = 0 : i64, tpu.core_type = #tpu.core_type<tc>} {
    %c0 = arith.constant 0 : index
    %c0_0 = arith.constant 0 : index
    %0 = vector.load %arg0[%c0, %c0_0] : memref<56x128xf32, #tpu.memory_space<vmem>>, vector<8x4xf32>
    %1 = tpu.iota {dimensions = array<i32: 1>} : vector<8x4xi32>
    %cst = arith.constant dense<0xFF800000> : vector<8xf32>
    %2 = vector.multi_reduction <maximumf>, %0, %cst [1] : vector<8x4xf32> to vector<8xf32>
    %3 = vector.shape_cast %2 : vector<8xf32> to vector<8x1xf32>
    %4 = vector.broadcast %3 : vector<8x1xf32> to vector<8x4xf32>
    %5 = arith.cmpf oeq, %0, %4 : vector<8x4xf32>
    %c4_i32 = arith.constant 4 : i32
    %6 = vector.broadcast %c4_i32 : i32 to vector<8x4xi32>
    %7 = arith.select %5, %1, %6 : vector<8x4xi1>, vector<8x4xi32>
    %cst_1 = arith.constant dense<2147483647> : vector<8xi32>
    %8 = vector.multi_reduction <minsi>, %7, %cst_1 [1] : vector<8x4xi32> to vector<8xi32>
    %9 = vector.shape_cast %8 : vector<8xi32> to vector<8x1xi32>
    %c8 = arith.constant 8 : index
    %c0_2 = arith.constant 0 : index
    %10 = vector.load %arg0[%c8, %c0_2] : memref<56x128xf32, #tpu.memory_space<vmem>>, vector<8x40xf32>
    %c24 = arith.constant 24 : index
    %c0_3 = arith.constant 0 : index
    %11 = vector.load %arg0[%c24, %c0_3] : memref<56x128xf32, #tpu.memory_space<vmem>>, vector<8x40xf32>
    %c0_i32 = arith.constant 0 : i32
    %12 = vector.broadcast %c0_i32 : i32 to vector<8x1xi32>
    %13 = arith.cmpi eq, %9, %12 : vector<8x1xi32>
    %cst_4 = arith.constant 0.000000e+00 : f32
    %14 = vector.shape_cast %13 : vector<8x1xi1> to vector<8x1xi1>
    %15 = vector.broadcast %14 : vector<8x1xi1> to vector<8x40xi1>
    %16 = vector.broadcast %cst_4 : f32 to vector<8x40xf32>
    %17 = arith.select %15, %11, %16 : vector<8x40xi1>, vector<8x40xf32>
    %18 = arith.addf %10, %17 : vector<8x40xf32>
    %c32 = arith.constant 32 : index
    %c0_5 = arith.constant 0 : index
    %19 = vector.load %arg0[%c32, %c0_5] : memref<56x128xf32, #tpu.memory_space<vmem>>, vector<8x40xf32>
    %c1_i32 = arith.constant 1 : i32
    %20 = vector.broadcast %c1_i32 : i32 to vector<8x1xi32>
    %21 = arith.cmpi eq, %9, %20 : vector<8x1xi32>
    %cst_6 = arith.constant 0.000000e+00 : f32
    %22 = vector.shape_cast %21 : vector<8x1xi1> to vector<8x1xi1>
    %23 = vector.broadcast %22 : vector<8x1xi1> to vector<8x40xi1>
    %24 = vector.broadcast %cst_6 : f32 to vector<8x40xf32>
    %25 = arith.select %23, %19, %24 : vector<8x40xi1>, vector<8x40xf32>
    %26 = arith.addf %18, %25 : vector<8x40xf32>
    %c40 = arith.constant 40 : index
    %c0_7 = arith.constant 0 : index
    %27 = vector.load %arg0[%c40, %c0_7] : memref<56x128xf32, #tpu.memory_space<vmem>>, vector<8x40xf32>
    %c2_i32 = arith.constant 2 : i32
    %28 = vector.broadcast %c2_i32 : i32 to vector<8x1xi32>
    %29 = arith.cmpi eq, %9, %28 : vector<8x1xi32>
    %cst_8 = arith.constant 0.000000e+00 : f32
    %30 = vector.shape_cast %29 : vector<8x1xi1> to vector<8x1xi1>
    %31 = vector.broadcast %30 : vector<8x1xi1> to vector<8x40xi1>
    %32 = vector.broadcast %cst_8 : f32 to vector<8x40xf32>
    %33 = arith.select %31, %27, %32 : vector<8x40xi1>, vector<8x40xf32>
    %34 = arith.addf %26, %33 : vector<8x40xf32>
    %c48 = arith.constant 48 : index
    %c0_9 = arith.constant 0 : index
    %35 = vector.load %arg0[%c48, %c0_9] : memref<56x128xf32, #tpu.memory_space<vmem>>, vector<8x40xf32>
    %c3_i32 = arith.constant 3 : i32
    %36 = vector.broadcast %c3_i32 : i32 to vector<8x1xi32>
    %37 = arith.cmpi eq, %9, %36 : vector<8x1xi32>
    %cst_10 = arith.constant 0.000000e+00 : f32
    %38 = vector.shape_cast %37 : vector<8x1xi1> to vector<8x1xi1>
    %39 = vector.broadcast %38 : vector<8x1xi1> to vector<8x40xi1>
    %40 = vector.broadcast %cst_10 : f32 to vector<8x40xf32>
    %41 = arith.select %39, %35, %40 : vector<8x40xi1>, vector<8x40xf32>
    %42 = arith.addf %34, %41 : vector<8x40xf32>
    %c0_11 = arith.constant 0 : index
    %c0_12 = arith.constant 0 : index
    %43 = vector.load %arg1[%c0_11, %c0_12] : memref<136x128xf32, #tpu.memory_space<vmem>>, vector<40x96xf32>
    %c40_13 = arith.constant 40 : index
    %c0_14 = arith.constant 0 : index
    %44 = vector.load %arg1[%c40_13, %c0_14] : memref<136x128xf32, #tpu.memory_space<vmem>>, vector<1x96xf32>
    %cst_15 = arith.constant dense<0.000000e+00> : vector<8x96xf32>
    %45 = tpu.matmul %42, %43, %cst_15 {dimension_numbers = #tpu.dot_dimension_numbers<[1], [0], [0], [1], [0, 0, 1, 1], [], []>} : vector<8x40xf32>, vector<40x96xf32>, vector<8x96xf32> -> vector<8x96xf32>
    %46 = vector.broadcast %44 : vector<1x96xf32> to vector<8x96xf32>
    %47 = arith.addf %45, %46 : vector<8x96xf32>
    %48 = vector.extract_strided_slice %47 {offsets = [0, 0], sizes = [8, 64], strides = [1, 1]} : vector<8x96xf32> to vector<8x64xf32>
    %49 = math.tanh %48 : vector<8x64xf32>
    %50 = vector.extract_strided_slice %47 {offsets = [0, 64], sizes = [8, 32], strides = [1, 1]} : vector<8x96xf32> to vector<8x32xf32>
    %c48_16 = arith.constant 48 : index
    %c0_17 = arith.constant 0 : index
    %51 = vector.load %arg1[%c48_16, %c0_17] : memref<136x128xf32, #tpu.memory_space<vmem>>, vector<64x32xf32>
    %c112 = arith.constant 112 : index
    %c0_18 = arith.constant 0 : index
    %52 = vector.load %arg1[%c112, %c0_18] : memref<136x128xf32, #tpu.memory_space<vmem>>, vector<1x32xf32>
    %cst_19 = arith.constant dense<0.000000e+00> : vector<8x32xf32>
    %53 = tpu.matmul %49, %51, %cst_19 {dimension_numbers = #tpu.dot_dimension_numbers<[1], [0], [0], [1], [0, 0, 1, 1], [], []>} : vector<8x64xf32>, vector<64x32xf32>, vector<8x32xf32> -> vector<8x32xf32>
    %54 = vector.broadcast %52 : vector<1x32xf32> to vector<8x32xf32>
    %55 = arith.addf %53, %54 : vector<8x32xf32>
    %56 = vector.extract_strided_slice %55 {offsets = [0, 0], sizes = [8, 16], strides = [1, 1]} : vector<8x32xf32> to vector<8x16xf32>
    %57 = vector.extract_strided_slice %55 {offsets = [0, 16], sizes = [8, 16], strides = [1, 1]} : vector<8x32xf32> to vector<8x16xf32>
    %c16 = arith.constant 16 : index
    %c0_20 = arith.constant 0 : index
    %58 = vector.load %arg0[%c16, %c0_20] : memref<56x128xf32, #tpu.memory_space<vmem>>, vector<8x16xf32>
    %59 = arith.addf %56, %58 : vector<8x16xf32>
    %cst_21 = arith.constant 1.000000e+00 : f32
    %60 = vector.broadcast %cst_21 : f32 to vector<8x16xf32>
    %61 = arith.mulf %59, %60 : vector<8x16xf32>
    %cst_22 = arith.constant dense<0xFF800000> : vector<8xf32>
    %62 = vector.multi_reduction <maximumf>, %61, %cst_22 [1] : vector<8x16xf32> to vector<8xf32>
    %63 = vector.shape_cast %62 : vector<8xf32> to vector<8x1xf32>
    %64 = vector.broadcast %63 : vector<8x1xf32> to vector<8x16xf32>
    %65 = arith.subf %61, %64 : vector<8x16xf32>
    %66 = math.exp %65 : vector<8x16xf32>
    %cst_23 = arith.constant dense<0.000000e+00> : vector<8xf32>
    %67 = vector.multi_reduction <add>, %66, %cst_23 [1] : vector<8x16xf32> to vector<8xf32>
    %68 = vector.shape_cast %67 : vector<8xf32> to vector<8x1xf32>
    %69 = tpu.reciprocal %68 {approx = true} : vector<8x1xf32> -> vector<8x1xf32>
    %70 = arith.mulf %68, %69 : vector<8x1xf32>
    %cst_24 = arith.constant 2.000000e+00 : f32
    %71 = vector.broadcast %cst_24 : f32 to vector<8x1xf32>
    %72 = arith.subf %71, %70 : vector<8x1xf32>
    %73 = arith.mulf %69, %72 : vector<8x1xf32>
    %74 = vector.broadcast %73 : vector<8x1xf32> to vector<8x16xf32>
    %75 = arith.mulf %66, %74 : vector<8x16xf32>
    %c120 = arith.constant 120 : index
    %c0_25 = arith.constant 0 : index
    %76 = vector.load %arg1[%c120, %c0_25] : memref<136x128xf32, #tpu.memory_space<vmem>>, vector<16x32xf32>
    %cst_26 = arith.constant dense<0.000000e+00> : vector<8x32xf32>
    %77 = tpu.matmul %75, %76, %cst_26 {dimension_numbers = #tpu.dot_dimension_numbers<[1], [0], [0], [1], [0, 0, 1, 1], [], []>} : vector<8x16xf32>, vector<16x32xf32>, vector<8x32xf32> -> vector<8x32xf32>
    %78 = arith.addf %77, %50 : vector<8x32xf32>
    %79 = math.tanh %78 : vector<8x32xf32>
    %c0_27 = arith.constant 0 : index
    %c0_28 = arith.constant 0 : index
    %80 = vector.load %arg2[%c0_27, %c0_28] : memref<8x48xf32, #tpu.memory_space<vmem>>, vector<8x32xf32>
    tpu.vector_store %arg2[%c0_27, %c0_28], %79 {strides = array<i32>} : memref<8x48xf32, #tpu.memory_space<vmem>>, vector<8x32xf32>,
    %c0_29 = arith.constant 0 : index
    %c32_30 = arith.constant 32 : index
    %81 = vector.load %arg2[%c0_29, %c32_30] : memref<8x48xf32, #tpu.memory_space<vmem>>, vector<8x16xf32>
    tpu.vector_store %arg2[%c0_29, %c32_30], %57 {strides = array<i32>} : memref<8x48xf32, #tpu.memory_space<vmem>>, vector<8x16xf32>,
    return
  }
}

</mosaic_0001>

<llo_original>
// kernel: bottleneck_extractor.1
$region0: #{bottleneck_extractor.1}
  #allocation0 [shape = 'u32[]', space=smem, size = 0x4, offset = 0x4, fixed_abs, tag = 'smem constant byte address 0x4 - core index']
  #allocation1 [shape = 'u32[144,128]{1,0:T(1,128)}', space=vmem, size = 0x12000, scoped, tag = 'internal scratch']
  %s0 = inlined_call_operand.vmem [shape: f32[56,128], index: 0, kind: input, shape index: {}]
  %s1 = inlined_call_operand.vmem [shape: f32[136,128], index: 1, kind: input, shape index: {}]
  %s2 = inlined_call_operand.vmem [shape: f32[8,48], index: 2, kind: output, shape index: {}]
  %s3 = sld [smem:[#allocation0]]
  $region18: #{bottleneck_extractor.1} parent=0
    _
  %s5 = ssub.s32 1, %s3
  %s6 = scalar_select 0, %s5, %s3
  // Predicated region
  $region2: #{bottleneck_extractor.1} parent=0 // pred_check
    _
  $region3: #{bottleneck_extractor.1} parent=0 // pred_check_branch
    %8 = sbr.rel (0) target = $region5
  $region4: #{bottleneck_extractor.1} parent=0 // pred_region
    _
  $region5: #{bottleneck_extractor.1} parent=0 // pred_fallthru
    _
  // Predicated region
  $region6: #{bottleneck_extractor.1} parent=0 // pred_check
    _
  $region7: #{bottleneck_extractor.1} parent=0 // pred_check_branch
    %10 = sbr.rel (0) target = $region9
  $region8: #{bottleneck_extractor.1} parent=0 // pred_region
    _
  $region9: #{bottleneck_extractor.1} parent=0 // pred_fallthru
    _
  %v11 = vld [vmem:[%s0] sm:$0xff]
  %v12 = vlaneseq
  %v13 = vand.u32 %v12, 127
  %vm14 = vcmask 31744
  %v15 = vsel %vm14, %v11, -inf
  %16 = vmax.xlane.f32.xlu0 %v15
  %v17 = vpop.xlane.xlu0 %16
  %vm18 = vcmp.eq.f32.partialorder %v11, %v17
  %v19 = vsel %vm18, %v13, 4
  %v20 = vsel %vm14, %v19, 2147483647
  %v21 = vand.u32 %v20, 65535
  %v22 = vshra.s32 %v20, 16
  %v23 = vcvt.s32.f32 %v21
  %v24 = vcvt.s32.f32 %v22
  %25 = vmin.xlane.f32.xlu0 %v24
  %v26 = vpop.xlane.xlu0 %25
  %vm27 = vcmp.eq.f32.partialorder %v24, %v26
  %v28 = vsel %vm27, %v23, inf
  %29 = vmin.xlane.f32.xlu0 %v28
  %v30 = vpop.xlane.xlu0 %29
  %v31 = vcvt.f32.s32 %v30
  %v32 = vcvt.f32.s32 %v26
  %v33 = vshll.u32 %v32, 16
  %v34 = vadd.s32 %v33, %v31
  %v35 = vld [vmem:[%s0 + $0x8] sm:$0xff]
  %v36 = vld [vmem:[%s0 + $0x18] sm:$0xff]
  %vm37 = vcmp.eq.s32.totalorder %v34, 0
  %v38 = vsel %vm37, 1, 0
  %vm39 = vcmp.eq.s32.totalorder %v38, 1
  %v40 = vsel %vm39, %v36, 0.0
  %v41 = vadd.f32 %v35, %v40
  %v42 = vld [vmem:[%s0 + $0x20] sm:$0xff]
  %vm43 = vcmp.eq.s32.totalorder %v34, 1
  %v44 = vsel %vm43, 1, 0
  %vm45 = vcmp.eq.s32.totalorder %v44, 1
  %v46 = vsel %vm45, %v42, 0.0
  %v47 = vadd.f32 %v41, %v46
  %v48 = vld [vmem:[%s0 + $0x28] sm:$0xff]
  %vm49 = vcmp.eq.s32.totalorder %v34, 2
  %v50 = vsel %vm49, 1, 0
  %vm51 = vcmp.eq.s32.totalorder %v50, 1
  %v52 = vsel %vm51, %v48, 0.0
  %v53 = vadd.f32 %v47, %v52
  %v54 = vld [vmem:[%s0 + $0x30] sm:$0xff]
  %vm55 = vcmp.eq.s32.totalorder %v34, 3
  %v56 = vsel %vm55, 1, 0
  %vm57 = vcmp.eq.s32.totalorder %v56, 1
  %v58 = vsel %vm57, %v54, 0.0
  %v59 = vadd.f32 %v53, %v58
  %v60 = vld [vmem:[%s1] sm:$0xff]
  %v61 = vld [vmem:[%s1 + $0x8] sm:$0xff]
  %v62 = vld [vmem:[%s1 + $0x10] sm:$0xff]
  %v63 = vld [vmem:[%s1 + $0x18] sm:$0xff]
  %v64 = vld [vmem:[%s1 + $0x20] sm:$0xff]
  %v65 = vld [vmem:[%s1 + $0x28] sm:$0x1]
  %v66 = vlaneseq
  %v67 = vshrl.u32 %v66, 7
  %v68 = vsub.s32 0, %v67
  %v69 = vrot.slane %v65, %v68
  %vm70 = vcmask 326656
  %v72 = vsel %vm70, %v59, 0
  %74 = vmatprep.subr.mxu0 0.0
  %75 = vmatpush1.msra.mxu0 %v60
  %76 = vmatprep.subr.mxu0 0.0
  %77 = vmatpush1.msra.mxu0 %v61
  %78 = vmatprep.subr.mxu0 0.0
  %79 = vmatpush1.msra.mxu0 %v62
  %80 = vmatprep.subr.mxu0 0.0
  %81 = vmatpush1.msra.mxu0 %v63
  %82 = vmatprep.subr.mxu0 0.0
  %83 = vmatpush1.msra.mxu0 %v64
  %84 = vmatprep.subr.mxu0 0.0
  %85 = vmatpush1.msra.mxu0 0.0
  %86 = vmatprep.subr.mxu0 0.0
  %87 = vmatpush1.msra.mxu0 0.0
  %88 = vmatprep.subr.mxu0 0.0
  %89 = vmatpush1.msra.mxu0 0.0
  %90 = vmatprep.subr.mxu0 0.0
  %91 = vmatpush1.msra.mxu0 0.0
  %92 = vmatprep.subr.mxu0 0.0
  %93 = vmatpush1.msra.mxu0 0.0
  %94 = vmatprep.subr.mxu0 0.0
  %95 = vmatpush1.msra.mxu0 0.0
  %96 = vmatprep.subr.mxu0 0.0
  %97 = vmatpush1.msra.mxu0 0.0
  %98 = vmatprep.subr.mxu0 0.0
  %99 = vmatpush1.msra.mxu0 0.0
  %100 = vmatprep.subr.mxu0 0.0
  %101 = vmatpush1.msra.mxu0 0.0
  %102 = vmatprep.subr.mxu0 0.0
  %103 = vmatpush1.msra.mxu0 0.0
  %104 = vmatprep.subr.mxu0 0.0
  %105 = vmatpush1.msra.mxu0 0.0
  %106 = vmatprep.subr.mxu0 0.0
  %107 = vmatpush1.msra.mxu0 0.0
  %108 = vmatprep.subr.mxu0 0.0
  %109 = vmatpush1.msra.mxu0 0.0
  %110 = vmatprep.subr.mxu0 0.0
  %111 = vmatpush1.msra.mxu0 0.0
  %112 = vmatprep.subr.mxu0 0.0
  %113 = vmatpush1.msra.mxu0 0.0
  %114 = vmatprep.subr.mxu0 0.0
  %115 = vmatpush1.msra.mxu0 0.0
  %116 = vmatprep.subr.mxu0 0.0
  %117 = vmatpush1.msra.mxu0 0.0
  %118 = vmatprep.subr.mxu0 0.0
  %119 = vmatpush1.msra.mxu0 0.0
  %120 = vmatprep.subr.mxu0 0.0
  %121 = vmatpush1.msra.mxu0 0.0
  %122 = vmatprep.subr.mxu0 0.0
  %123 = vmatpush1.msra.mxu0 0.0
  %124 = vmatprep.subr.mxu0 0.0
  %125 = vmatpush1.msra.mxu0 0.0
  %126 = vmatprep.subr.mxu0 0.0
  %127 = vmatpush1.msra.mxu0 0.0
  %128 = vmatprep.subr.mxu0 0.0
  %129 = vmatpush1.msra.mxu0 0.0
  %130 = vmatprep.subr.mxu0 0.0
  %131 = vmatpush1.msra.mxu0 0.0
  %132 = vmatprep.subr.mxu0 0.0
  %133 = vmatpush1.msra.mxu0 0.0
  %134 = vmatprep.subr.mxu0 0.0
  %135 = vmatpush1.msra.mxu0 0.0
  %136 = vmatprep.subr.mxu0 0.0
  %137 = vmatpush1.msra.mxu0 0.0
  %138 = vmatprep.mubr.f32.mxu0 0.0
  %139 = vmatmul.mubr.f32.gmra.mrb[0].mxu0 %v72
  %v140 = vpop.f32.mrb[0].mxu0
  %v141 = vadd.f32 %v69, %v140
  %v142 = vpop.f32.mrb[0].mxu0
  %143 = vdwg.mxu0
  %v144 = vtanh.pop %v141
  %v145 = vld [vmem:[%s1 + $0x30] sm:$0xff]
  %v146 = vld [vmem:[%s1 + $0x38] sm:$0xff]
  %v147 = vld [vmem:[%s1 + $0x40] sm:$0xff]
  %v148 = vld [vmem:[%s1 + $0x48] sm:$0xff]
  %v149 = vld [vmem:[%s1 + $0x50] sm:$0xff]
  %v150 = vld [vmem:[%s1 + $0x58] sm:$0xff]
  %v151 = vld [vmem:[%s1 + $0x60] sm:$0xff]
  %v152 = vld [vmem:[%s1 + $0x68] sm:$0xff]
  %v153 = vld [vmem:[%s1 + $0x70] sm:$0x1]
  %v154 = vlaneseq
  %v155 = vshrl.u32 %v154, 7
  %v156 = vsub.s32 0, %v155
  %v157 = vrot.slane %v153, %v156
  %vm158 = vcmask 523264
  %v160 = vsel %vm158, %v144, 0
  %162 = vmatprep.subr.mxu0 0.0
  %163 = vmatpush1.msra.mxu0 %v145
  %164 = vmatprep.subr.mxu0 0.0
  %165 = vmatpush1.msra.mxu0 %v146
  %166 = vmatprep.subr.mxu0 0.0
  %167 = vmatpush1.msra.mxu0 %v147
  %168 = vmatprep.subr.mxu0 0.0
  %169 = vmatpush1.msra.mxu0 %v148
  %170 = vmatprep.subr.mxu0 0.0
  %171 = vmatpush1.msra.mxu0 %v149
  %172 = vmatprep.subr.mxu0 0.0
  %173 = vmatpush1.msra.mxu0 %v150
  %174 = vmatprep.subr.mxu0 0.0
  %175 = vmatpush1.msra.mxu0 %v151
  %176 = vmatprep.subr.mxu0 0.0
  %177 = vmatpush1.msra.mxu0 %v152
  %178 = vmatprep.subr.mxu0 0.0
  %179 = vmatpush1.msra.mxu0 0.0
  %180 = vmatprep.subr.mxu0 0.0
  %181 = vmatpush1.msra.mxu0 0.0
  %182 = vmatprep.subr.mxu0 0.0
  %183 = vmatpush1.msra.mxu0 0.0
  %184 = vmatprep.subr.mxu0 0.0
  %185 = vmatpush1.msra.mxu0 0.0
  %186 = vmatprep.subr.mxu0 0.0
  %187 = vmatpush1.msra.mxu0 0.0
  %188 = vmatprep.subr.mxu0 0.0
  %189 = vmatpush1.msra.mxu0 0.0
  %190 = vmatprep.subr.mxu0 0.0
  %191 = vmatpush1.msra.mxu0 0.0
  %192 = vmatprep.subr.mxu0 0.0
  %193 = vmatpush1.msra.mxu0 0.0
  %194 = vmatprep.subr.mxu0 0.0
  %195 = vmatpush1.msra.mxu0 0.0
  %196 = vmatprep.subr.mxu0 0.0
  %197 = vmatpush1.msra.mxu0 0.0
  %198 = vmatprep.subr.mxu0 0.0
  %199 = vmatpush1.msra.mxu0 0.0
  %200 = vmatprep.subr.mxu0 0.0
  %201 = vmatpush1.msra.mxu0 0.0
  %202 = vmatprep.subr.mxu0 0.0
  %203 = vmatpush1.msra.mxu0 0.0
  %204 = vmatprep.subr.mxu0 0.0
  %205 = vmatpush1.msra.mxu0 0.0
  %206 = vmatprep.subr.mxu0 0.0
  %207 = vmatpush1.msra.mxu0 0.0
  %208 = vmatprep.subr.mxu0 0.0
  %209 = vmatpush1.msra.mxu0 0.0
  %210 = vmatprep.subr.mxu0 0.0
  %211 = vmatpush1.msra.mxu0 0.0
  %212 = vmatprep.subr.mxu0 0.0
  %213 = vmatpush1.msra.mxu0 0.0
  %214 = vmatprep.subr.mxu0 0.0
  %215 = vmatpush1.msra.mxu0 0.0
  %216 = vmatprep.subr.mxu0 0.0
  %217 = vmatpush1.msra.mxu0 0.0
  %218 = vmatprep.subr.mxu0 0.0
  %219 = vmatpush1.msra.mxu0 0.0
  %220 = vmatprep.subr.mxu0 0.0
  %221 = vmatpush1.msra.mxu0 0.0
  %222 = vmatprep.subr.mxu0 0.0
  %223 = vmatpush1.msra.mxu0 0.0
  %224 = vmatprep.subr.mxu0 0.0
  %225 = vmatpush1.msra.mxu0 0.0
  %226 = vmatprep.mubr.f32.mxu0 0.0
  %227 = vmatmul.mubr.f32.gmra.mrb[0].mxu0 %v160
  %v228 = vpop.f32.mrb[0].mxu0
  %v229 = vadd.f32 %v157, %v228
  %v230 = vpop.f32.mrb[0].mxu0
  %231 = vdwg.mxu0
  %v232 = vld [vmem:[%s0 + $0x10] sm:$0xff]
  %v233 = vadd.f32 %v229, %v232
  %vm234 = vcmask 130048
  %v235 = vsel %vm234, %v233, -inf
  %236 = vmax.xlane.f32.xlu0 %v235
  %v237 = vpop.xlane.xlu0 %236
  %v238 = vsub.f32 %v233, %v237
  %v239 = vmul.f32 %v238, 1.442695
  %v240 = vpow.pop %v239
  %v241 = vsel %vm234, %v240, 0.0
  %242 = vadd.xlane.f32.xlu0 %v241
  %v243 = vpop.xlane.xlu0 %242
  %v244 = vrcp.pop %v243
  %v245 = vmul.f32 %v243, %v244
  %v246 = vsub.f32 2.0, %v245
  %v247 = vmul.f32 %v244, %v246
  %v248 = vmul.f32 %v240, %v247
  %v249 = vld [vmem:[%s1 + $0x78] sm:$0xff]
  %v250 = vld [vmem:[%s1 + $0x80] sm:$0xff]
  %252 = vrot.lane.b32.xlu0 %v141, 64
  %v253 = vpop.permute.xlu0 %252
  %v256 = vsel %vm234, %v248, 0
  %258 = vmatprep.subr.mxu0 0.0
  %259 = vmatpush1.msra.mxu0 %v249
  %260 = vmatprep.subr.mxu0 0.0
  %261 = vmatpush1.msra.mxu0 %v250
  %262 = vmatprep.subr.mxu0 0.0
  %263 = vmatpush1.msra.mxu0 0.0
  %264 = vmatprep.subr.mxu0 0.0
  %265 = vmatpush1.msra.mxu0 0.0
  %266 = vmatprep.subr.mxu0 0.0
  %267 = vmatpush1.msra.mxu0 0.0
  %268 = vmatprep.subr.mxu0 0.0
  %269 = vmatpush1.msra.mxu0 0.0
  %270 = vmatprep.subr.mxu0 0.0
  %271 = vmatpush1.msra.mxu0 0.0
  %272 = vmatprep.subr.mxu0 0.0
  %273 = vmatpush1.msra.mxu0 0.0
  %274 = vmatprep.subr.mxu0 0.0
  %275 = vmatpush1.msra.mxu0 0.0
  %276 = vmatprep.subr.mxu0 0.0
  %277 = vmatpush1.msra.mxu0 0.0
  %278 = vmatprep.subr.mxu0 0.0
  %279 = vmatpush1.msra.mxu0 0.0
  %280 = vmatprep.subr.mxu0 0.0
  %281 = vmatpush1.msra.mxu0 0.0
  %282 = vmatprep.subr.mxu0 0.0
  %283 = vmatpush1.msra.mxu0 0.0
  %284 = vmatprep.subr.mxu0 0.0
  %285 = vmatpush1.msra.mxu0 0.0
  %286 = vmatprep.subr.mxu0 0.0
  %287 = vmatpush1.msra.mxu0 0.0
  %288 = vmatprep.subr.mxu0 0.0
  %289 = vmatpush1.msra.mxu0 0.0
  %290 = vmatprep.subr.mxu0 0.0
  %291 = vmatpush1.msra.mxu0 0.0
  %292 = vmatprep.subr.mxu0 0.0
  %293 = vmatpush1.msra.mxu0 0.0
  %294 = vmatprep.subr.mxu0 0.0
  %295 = vmatpush1.msra.mxu0 0.0
  %296 = vmatprep.subr.mxu0 0.0
  %297 = vmatpush1.msra.mxu0 0.0
  %298 = vmatprep.subr.mxu0 0.0
  %299 = vmatpush1.msra.mxu0 0.0
  %300 = vmatprep.subr.mxu0 0.0
  %301 = vmatpush1.msra.mxu0 0.0
  %302 = vmatprep.subr.mxu0 0.0
  %303 = vmatpush1.msra.mxu0 0.0
  %304 = vmatprep.subr.mxu0 0.0
  %305 = vmatpush1.msra.mxu0 0.0
  %306 = vmatprep.subr.mxu0 0.0
  %307 = vmatpush1.msra.mxu0 0.0
  %308 = vmatprep.subr.mxu0 0.0
  %309 = vmatpush1.msra.mxu0 0.0
  %310 = vmatprep.subr.mxu0 0.0
  %311 = vmatpush1.msra.mxu0 0.0
  %312 = vmatprep.subr.mxu0 0.0
  %313 = vmatpush1.msra.mxu0 0.0
  %314 = vmatprep.subr.mxu0 0.0
  %315 = vmatpush1.msra.mxu0 0.0
  %316 = vmatprep.subr.mxu0 0.0
  %317 = vmatpush1.msra.mxu0 0.0
  %318 = vmatprep.subr.mxu0 0.0
  %319 = vmatpush1.msra.mxu0 0.0
  %320 = vmatprep.subr.mxu0 0.0
  %321 = vmatpush1.msra.mxu0 0.0
  %322 = vmatprep.mubr.f32.mxu0 0.0
  %323 = vmatmul.mubr.f32.gmra.mrb[0].mxu0 %v256
  %v324 = vpop.f32.mrb[0].mxu0
  %v325 = vadd.f32 %v253, %v324
  %v326 = vpop.f32.mrb[0].mxu0
  %327 = vdwg.mxu0
  %v328 = vtanh.pop %v325
  %vm329 = vcmask 261120
  %330 = vst.msk [vmem:[%s2] sm:$0xff] %vm329, %v328
  %332 = vrot.lane.b32.xlu0 %v229, 16
  %v333 = vpop.permute.xlu0 %332
  %vm335 = vcmask 392448
  %336 = vst.msk [vmem:[%s2] sm:$0xff] %vm335, %v333
  // Predicated region
  $region10: #{bottleneck_extractor.1} parent=0 // pred_check
    _
  $region11: #{bottleneck_extractor.1} parent=0 // pred_check_branch
    %338 = sbr.rel (0) target = $region13
  $region12: #{bottleneck_extractor.1} parent=0 // pred_region
    _
  $region13: #{bottleneck_extractor.1} parent=0 // pred_fallthru
    _
  // Predicated region
  $region14: #{bottleneck_extractor.1} parent=0 // pred_check
    _
  $region15: #{bottleneck_extractor.1} parent=0 // pred_check_branch
    %340 = sbr.rel (0) target = $region17
  $region16: #{bottleneck_extractor.1} parent=0 // pred_region
    _
  $region17: #{bottleneck_extractor.1} parent=0 // pred_fallthru
    _

</llo_original>
